<compile_context>
chip_gen: v6e
topology: v6e:2x2x1
jax: 0.10.0
libtpu: 0.0.40
codegen_flags: <defaults>
</compile_context>

<pallas_src>
import functools

import jax
import jax.numpy as jnp
from jax import lax
from jax.experimental import pallas as pl
from jax.experimental.pallas import tpu as pltpu


def _round_up(x, m):
    return ((x + m - 1) // m) * m


# ----------------------------------------------------------------------------
# Kernel 1: sequential recurrence over time (input projection pre-hoisted).
# ----------------------------------------------------------------------------
def rnn_recurrence_kernel(xw_ref, h0_ref, whh_ref, y_ref, hT_ref, h_scr,
                          *, seq_len, mask_tail):
    """One grid step handles one (batch block, time block).

    xw_ref : (T_BLK, B_BLK, H)  precomputed x_t @ W_ih^T + (b_ih + b_hh), f32
    h0_ref : (B_BLK, H)         initial hidden state, f32
    whh_ref: (H, H)             W_hh^T (resident), f32
    y_ref  : (T_BLK, B_BLK, H)  per-step hidden states, bf16 (fed to kernel 2)
    hT_ref : (B_BLK, H)         final hidden state, f32
    h_scr  : (B_BLK, H) VMEM    hidden-state carry across time blocks
    """
    t_blk = xw_ref.shape[0]

    @pl.when(pl.program_id(1) == 0)          # grid = (batch blocks, time blocks)
    def _():
        h_scr[...] = h0_ref[...]

    if mask_tail:
        t_base = pl.program_id(1) * t_blk

    def step(i, h):
        h_new = jnp.tanh(
            xw_ref[i]
            + jnp.dot(h, whh_ref[...], preferred_element_type=jnp.float32))
        if mask_tail:
            # Padded tail time steps must not advance the hidden state.
            h_new = jnp.where(t_base + i < seq_len, h_new, h)
        y_ref[i] = h_new.astype(y_ref.dtype)
        return h_new

    h = lax.fori_loop(0, t_blk, step, h_scr[...], unroll=min(t_blk, 8))
    h_scr[...] = h
    hT_ref[...] = h                           # written every block (robust)


# ----------------------------------------------------------------------------
# Kernel 2: embarrassingly-parallel output projection, tiled over (V, M).
# ----------------------------------------------------------------------------
def output_proj_kernel(y_ref, wout_ref, bout_ref, out_ref):
    out_ref[...] = (
        jnp.dot(y_ref[...], wout_ref[...], preferred_element_type=jnp.float32)
        + bout_ref[...]).astype(out_ref.dtype)


# ----------------------------------------------------------------------------
# Wrapper mirroring RNNModel.forward
# ----------------------------------------------------------------------------
def rnn_model_forward(inputs, state, params, vocab_size, num_hiddens,
                      *, t_blk=8):
    """inputs : (batch, num_steps) int32 token ids
       state  : (1, batch, num_hiddens) float32
       returns (output (num_steps*batch, vocab_size),
                new_state (1, batch, num_hiddens))"""
    B, T = inputs.shape
    V, H = vocab_size, num_hiddens
    f32, bf16 = jnp.float32, jnp.bfloat16

    # Lane/sublane-aligned padded dims (zeros stay zeros through tanh(0)=0,
    # so padded rows/cols never contaminate real outputs).
    B_pad = _round_up(B, 8)
    H_pad = _round_up(H, 128)
    V_pad = _round_up(V, 128)
    T_pad = _round_up(T, t_blk)

    # ---- Input projection hoisted off the serial critical path --------------
    # one_hot(tok) @ W_ih^T == row-gather of W_ih^T; fold the RNN bias in.
    # NOTE: assumes token ids are in [0, V) (jnp.take clips OOB indices,
    # whereas a true one-hot would produce a zero row).
    w_ih_t = jnp.pad(params["w_ih"].T.astype(f32),
                     ((0, 0), (0, H_pad - H)))                       # (V, H_pad)
    b_rnn = jnp.pad((params["b_ih"] + params["b_hh"]).astype(f32),
                    (0, H_pad - H))                                  # (H_pad,)
    xw = jnp.take(w_ih_t, inputs.T, axis=0) + b_rnn                  # (T, B, H_pad)
    xw = jnp.pad(xw, ((0, T_pad - T), (0, B_pad - B), (0, 0)))       # (T_pad, B_pad, H_pad)

    w_hh_t = jnp.pad(params["w_hh"].T.astype(f32),
                     ((0, H_pad - H), (0, H_pad - H)))               # (H_pad, H_pad)
    h0 = jnp.pad(state[0].astype(f32),
                 ((0, B_pad - B), (0, H_pad - H)))                   # (B_pad, H_pad)

    # Batch blocking: split across TensorCores (v7x) when B is large enough.
    n_b_blocks = 2 if (B_pad % 16 == 0) else 1
    b_blk = B_pad // n_b_blocks
    n_t_blocks = T_pad // t_blk
    mask_tail = (T_pad != T)

    rec_kernel = functools.partial(
        rnn_recurrence_kernel, seq_len=T, mask_tail=mask_tail)

    # Double-buffered VMEM footprint for the recurrence.
    rec_vmem = (2 * (t_blk * b_blk * H_pad * 4)      # xw blocks   (f32)
                + 2 * (t_blk * b_blk * H_pad * 2)    # ys blocks   (bf16)
                + 2 * (b_blk * H_pad * 4)            # h0
                + 2 * (H_pad * H_pad * 4)            # W_hh^T
                + 2 * (b_blk * H_pad * 4)            # hT
                + (b_blk * H_pad * 4))               # h_scr
    rec_vmem_limit = int(min(64 * 2**20, max(32 * 2**20, 2 * rec_vmem)))

    ys, h_final = pl.pallas_call(
        rec_kernel,
        grid_spec=pltpu.PrefetchScalarGridSpec(
            num_scalar_prefetch=0,
            grid=(n_b_blocks, n_t_blocks),
            in_specs=[
                pl.BlockSpec((t_blk, b_blk, H_pad), lambda b, t: (t, b, 0)),  # xW
                pl.BlockSpec((b_blk, H_pad), lambda b, t: (b, 0)),            # h0
                pl.BlockSpec((H_pad, H_pad), lambda b, t: (0, 0)),            # W_hh^T
            ],
            out_specs=[
                pl.BlockSpec((t_blk, b_blk, H_pad), lambda b, t: (t, b, 0)),  # hidden states
                pl.BlockSpec((b_blk, H_pad), lambda b, t: (b, 0)),            # final hidden
            ],
            scratch_shapes=[pltpu.VMEM((b_blk, H_pad), jnp.float32)],
        ),
        out_shape=(
            jax.ShapeDtypeStruct((T_pad, B_pad, H_pad), bf16),
            jax.ShapeDtypeStruct((B_pad, H_pad), f32),
        ),
        compiler_params=pltpu.CompilerParams(
            dimension_semantics=("parallel", "arbitrary"),  # time is serial
            vmem_limit_bytes=rec_vmem_limit,
        ),
    )(xw, h0, w_hh_t)

    # ---- Output projection: tiled (V, M) grid, bf16 operands, f32 accumulate
    M = T_pad * B_pad                                 # multiple of 8 by construction
    y_flat = ys.reshape(M, H_pad)                     # bf16
    w_out_t = jnp.pad(params["w_out"].T.astype(f32),
                      ((0, H_pad - H), (0, V_pad - V))).astype(bf16)  # (H_pad, V_pad)
    b_out = jnp.pad(params["b_out"].astype(f32),
                    (0, V_pad - V)).reshape(1, V_pad)                 # (1, V_pad)

    tm = 8
    while tm < 256 and M % (tm * 2) == 0:             # largest power-of-two tile <= 256
        tm *= 2
    v_tile = 256 if V_pad % 256 == 0 else 128
    n_m, n_v = M // tm, V_pad // v_tile

    proj_vmem = (2 * (tm * H_pad * 2)                 # y tiles     (bf16)
                 + 2 * (H_pad * v_tile * 2)           # W_out tiles (bf16)
                 + 2 * (8 * v_tile * 4)               # bias tiles
                 + 2 * (tm * v_tile * 4))             # output tiles (f32)
    proj_vmem_limit = int(min(64 * 2**20, max(32 * 2**20, 2 * proj_vmem)))

    out_pad = pl.pallas_call(
        output_proj_kernel,
        grid_spec=pltpu.PrefetchScalarGridSpec(
            num_scalar_prefetch=0,
            grid=(n_v, n_m),                           # weight V-tile outer => DMA'd once
            in_specs=[
                pl.BlockSpec((tm, H_pad), lambda v, m: (m, 0)),       # hidden rows
                pl.BlockSpec((H_pad, v_tile), lambda v, m: (0, v)),   # W_out^T V-tile
                pl.BlockSpec((1, v_tile), lambda v, m: (0, v)),       # b_out V-tile
            ],
            out_specs=pl.BlockSpec((tm, v_tile), lambda v, m: (m, v)),
        ),
        out_shape=jax.ShapeDtypeStruct((M, V_pad), f32),
        compiler_params=pltpu.CompilerParams(
            dimension_semantics=("parallel", "parallel"),
            vmem_limit_bytes=proj_vmem_limit,
        ),
    )(y_flat, w_out_t, b_out)

    # ---- Unpad and restore PyTorch's (T*B, V) row ordering -------------------
    output = (out_pad.reshape(T_pad, B_pad, V_pad)[:T, :B, :V]
              .reshape(T * B, V))
    new_state = h_final[:B, :H][None, :, :]
    return output, new_state


def init_params(key, vocab_size, num_hiddens):
    V, H = vocab_size, num_hiddens
    k = 1.0 / jnp.sqrt(jnp.float32(H))
    keys = jax.random.split(key, 6)
    uni = lambda kk, shape: jax.random.uniform(kk, shape, jnp.float32, -k, k)
    return {
        "w_ih": uni(keys[0], (H, V)),   # PyTorch weight_ih_l0
        "w_hh": uni(keys[1], (H, H)),   # PyTorch weight_hh_l0
        "b_ih": uni(keys[2], (H,)),
        "b_hh": uni(keys[3], (H,)),
        "w_out": uni(keys[4], (V, H)),  # PyTorch linear.weight
        "b_out": uni(keys[5], (V,)),
    }


def reference_forward(inputs, state, params, vocab_size, num_hiddens):
    """Pure-JAX reference mirroring PyTorch semantics for verification."""
    x = jax.nn.one_hot(inputs.T, vocab_size, dtype=jnp.float32)  # (T, B, V)
    h = state[0]
    b = params["b_ih"] + params["b_hh"]
    ys = []
    for t in range(x.shape[0]):
        h = jnp.tanh(x[t] @ params["w_ih"].T + h @ params["w_hh"].T + b)
        ys.append(h)
    y = jnp.stack(ys, axis=0)                                    # (T, B, H)
    out = y.reshape(-1, num_hiddens) @ params["w_out"].T + params["b_out"]
    return out, h[None]


if __name__ == "__main__":
    vocab_size = 16
    num_hiddens = 32
    batch_size = 4
    num_steps = 8

    key = jax.random.PRNGKey(0)
    k_params, k_tokens = jax.random.split(key)
    params = init_params(k_params, vocab_size, num_hiddens)

    inputs = jax.random.randint(k_tokens, (batch_size, num_steps), 0, vocab_size,
                                dtype=jnp.int32)
    state = jnp.zeros((1, batch_size, num_hiddens), dtype=jnp.float32)

    output, new_state = rnn_model_forward(inputs, state, params,
                                          vocab_size, num_hiddens)
    output = jax.block_until_ready(output)
    new_state = jax.block_until_ready(new_state)

    ref_out, ref_state = reference_forward(inputs, state, params,
                                           vocab_size, num_hiddens)

    assert output.shape == (num_steps * batch_size, vocab_size)
    assert new_state.shape == (1, batch_size, num_hiddens)
    # Hidden-state recurrence runs fully in f32 -> tight tolerance.
    assert jnp.allclose(new_state, ref_state, atol=1e-5, rtol=1e-5)
    # Projection uses bf16 operands (f32 accumulation) -> relaxed tolerance.
    assert jnp.allclose(output, ref_out, atol=5e-2, rtol=5e-2)

    print("KERNEL_OK")
</pallas_src>

<mosaic_0001>
module attributes {stable_mosaic.version = 11 : i64} {
  func.func @rnn_recurrence_kernel(%arg0: i32, %arg1: i32, %arg2: memref<8x8x128xf32, #tpu.memory_space<vmem>>, %arg3: memref<8x128xf32, #tpu.memory_space<vmem>>, %arg4: memref<128x128xf32, #tpu.memory_space<vmem>>, %arg5: memref<8x8x128xbf16, #tpu.memory_space<vmem>>, %arg6: memref<8x128xf32, #tpu.memory_space<vmem>>, %arg7: memref<8x128xf32, #tpu.memory_space<vmem>>) attributes {dimension_semantics = [#tpu.dimension_semantics<parallel>, #tpu.dimension_semantics<arbitrary>], iteration_bounds = array<i64: 1, 1>, scalar_prefetch = 0 : i64, scratch_operands = 1 : i64, tpu.core_type = #tpu.core_type<tc>, window_params = [{transform_indices = @transform_0, window_bounds = array<i64: 8, 8, 128>}, {transform_indices = @transform_1, window_bounds = array<i64: 8, 128>}, {pipeline_mode = #tpu.pipeline_mode<synchronous>, transform_indices = @transform_2, window_bounds = array<i64: 128, 128>}, {transform_indices = @transform_3, window_bounds = array<i64: 8, 8, 128>}, {transform_indices = @transform_4, window_bounds = array<i64: 8, 128>}]} {
    %c0_i32 = arith.constant 0 : i32
    %0 = arith.cmpi eq, %arg1, %c0_i32 : i32
    %1 = arith.extui %0 : i1 to i32
    %c0_i32_0 = arith.constant 0 : i32
    %2 = arith.cmpi ne, %1, %c0_i32_0 : i32
    scf.if %2 {
      %c0_62 = arith.constant 0 : index
      %c0_63 = arith.constant 0 : index
      %102 = vector.load %arg3[%c0_62, %c0_63] : memref<8x128xf32, #tpu.memory_space<vmem>>, vector<8x128xf32>
      %c0_64 = arith.constant 0 : index
      %c0_65 = arith.constant 0 : index
      %103 = vector.load %arg7[%c0_64, %c0_65] : memref<8x128xf32, #tpu.memory_space<vmem>>, vector<8x128xf32>
      tpu.vector_store %arg7[%c0_64, %c0_65], %102 {strides = array<i32>} : memref<8x128xf32, #tpu.memory_space<vmem>>, vector<8x128xf32>,
    } else {
    }
    %c0 = arith.constant 0 : index
    %c0_1 = arith.constant 0 : index
    %3 = vector.load %arg7[%c0, %c0_1] : memref<8x128xf32, #tpu.memory_space<vmem>>, vector<8x128xf32>
    %c0_i32_2 = arith.constant 0 : i32
    %4 = arith.index_cast %c0_i32_2 : i32 to index
    %c0_3 = arith.constant 0 : index
    %c0_4 = arith.constant 0 : index
    %5 = vector.load %arg2[%4, %c0_3, %c0_4] : memref<8x8x128xf32, #tpu.memory_space<vmem>>, vector<1x8x128xf32>
    %6 = vector.shape_cast %5 : vector<1x8x128xf32> to vector<8x128xf32>
    %c0_5 = arith.constant 0 : index
    %c0_6 = arith.constant 0 : index
    %7 = vector.load %arg4[%c0_5, %c0_6] : memref<128x128xf32, #tpu.memory_space<vmem>>, vector<128x128xf32>
    %cst = arith.constant dense<0.000000e+00> : vector<8x128xf32>
    %8 = tpu.matmul %3, %7, %cst {dimension_numbers = #tpu.dot_dimension_numbers<[1], [0], [0], [1], [0, 0, 1, 1], [], []>} : vector<8x128xf32>, vector<128x128xf32>, vector<8x128xf32> -> vector<8x128xf32>
    %9 = arith.addf %6, %8 : vector<8x128xf32>
    %10 = math.tanh %9 : vector<8x128xf32>
    %11 = arith.truncf %10 : vector<8x128xf32> to vector<8x128xbf16>
    %12 = arith.index_cast %c0_i32_2 : i32 to index
    %c0_7 = arith.constant 0 : index
    %c0_8 = arith.constant 0 : index
    %13 = vector.load %arg5[%12, %c0_7, %c0_8] : memref<8x8x128xbf16, #tpu.memory_space<vmem>>, vector<1x8x128xbf16>
    %14 = vector.shape_cast %13 : vector<1x8x128xbf16> to vector<8x128xbf16>
    %15 = vector.shape_cast %11 : vector<8x128xbf16> to vector<1x8x128xbf16>
    tpu.vector_store %arg5[%12, %c0_7, %c0_8], %15 {strides = array<i32>} : memref<8x8x128xbf16, #tpu.memory_space<vmem>>, vector<1x8x128xbf16>,
    %c1_i32 = arith.constant 1 : i32
    %16 = arith.index_cast %c1_i32 : i32 to index
    %c0_9 = arith.constant 0 : index
    %c0_10 = arith.constant 0 : index
    %17 = vector.load %arg2[%16, %c0_9, %c0_10] : memref<8x8x128xf32, #tpu.memory_space<vmem>>, vector<1x8x128xf32>
    %18 = vector.shape_cast %17 : vector<1x8x128xf32> to vector<8x128xf32>
    %c0_11 = arith.constant 0 : index
    %c0_12 = arith.constant 0 : index
    %19 = vector.load %arg4[%c0_11, %c0_12] : memref<128x128xf32, #tpu.memory_space<vmem>>, vector<128x128xf32>
    %cst_13 = arith.constant dense<0.000000e+00> : vector<8x128xf32>
    %20 = tpu.matmul %10, %19, %cst_13 {dimension_numbers = #tpu.dot_dimension_numbers<[1], [0], [0], [1], [0, 0, 1, 1], [], []>} : vector<8x128xf32>, vector<128x128xf32>, vector<8x128xf32> -> vector<8x128xf32>
    %21 = arith.addf %18, %20 : vector<8x128xf32>
    %22 = math.tanh %21 : vector<8x128xf32>
    %23 = arith.truncf %22 : vector<8x128xf32> to vector<8x128xbf16>
    %24 = arith.index_cast %c1_i32 : i32 to index
    %c0_14 = arith.constant 0 : index
    %c0_15 = arith.constant 0 : index
    %25 = vector.load %arg5[%24, %c0_14, %c0_15] : memref<8x8x128xbf16, #tpu.memory_space<vmem>>, vector<1x8x128xbf16>
    %26 = vector.shape_cast %25 : vector<1x8x128xbf16> to vector<8x128xbf16>
    %27 = vector.shape_cast %23 : vector<8x128xbf16> to vector<1x8x128xbf16>
    tpu.vector_store %arg5[%24, %c0_14, %c0_15], %27 {strides = array<i32>} : memref<8x8x128xbf16, #tpu.memory_space<vmem>>, vector<1x8x128xbf16>,
    %c2_i32 = arith.constant 2 : i32
    %28 = arith.index_cast %c2_i32 : i32 to index
    %c0_16 = arith.constant 0 : index
    %c0_17 = arith.constant 0 : index
    %29 = vector.load %arg2[%28, %c0_16, %c0_17] : memref<8x8x128xf32, #tpu.memory_space<vmem>>, vector<1x8x128xf32>
    %30 = vector.shape_cast %29 : vector<1x8x128xf32> to vector<8x128xf32>
    %c0_18 = arith.constant 0 : index
    %c0_19 = arith.constant 0 : index
    %31 = vector.load %arg4[%c0_18, %c0_19] : memref<128x128xf32, #tpu.memory_space<vmem>>, vector<128x128xf32>
    %cst_20 = arith.constant dense<0.000000e+00> : vector<8x128xf32>
    %32 = tpu.matmul %22, %31, %cst_20 {dimension_numbers = #tpu.dot_dimension_numbers<[1], [0], [0], [1], [0, 0, 1, 1], [], []>} : vector<8x128xf32>, vector<128x128xf32>, vector<8x128xf32> -> vector<8x128xf32>
    %33 = arith.addf %30, %32 : vector<8x128xf32>
    %34 = math.tanh %33 : vector<8x128xf32>
    %35 = arith.truncf %34 : vector<8x128xf32> to vector<8x128xbf16>
    %36 = arith.index_cast %c2_i32 : i32 to index
    %c0_21 = arith.constant 0 : index
    %c0_22 = arith.constant 0 : index
    %37 = vector.load %arg5[%36, %c0_21, %c0_22] : memref<8x8x128xbf16, #tpu.memory_space<vmem>>, vector<1x8x128xbf16>
    %38 = vector.shape_cast %37 : vector<1x8x128xbf16> to vector<8x128xbf16>
    %39 = vector.shape_cast %35 : vector<8x128xbf16> to vector<1x8x128xbf16>
    tpu.vector_store %arg5[%36, %c0_21, %c0_22], %39 {strides = array<i32>} : memref<8x8x128xbf16, #tpu.memory_space<vmem>>, vector<1x8x128xbf16>,
    %c3_i32 = arith.constant 3 : i32
    %40 = arith.index_cast %c3_i32 : i32 to index
    %c0_23 = arith.constant 0 : index
    %c0_24 = arith.constant 0 : index
    %41 = vector.load %arg2[%40, %c0_23, %c0_24] : memref<8x8x128xf32, #tpu.memory_space<vmem>>, vector<1x8x128xf32>
    %42 = vector.shape_cast %41 : vector<1x8x128xf32> to vector<8x128xf32>
    %c0_25 = arith.constant 0 : index
    %c0_26 = arith.constant 0 : index
    %43 = vector.load %arg4[%c0_25, %c0_26] : memref<128x128xf32, #tpu.memory_space<vmem>>, vector<128x128xf32>
    %cst_27 = arith.constant dense<0.000000e+00> : vector<8x128xf32>
    %44 = tpu.matmul %34, %43, %cst_27 {dimension_numbers = #tpu.dot_dimension_numbers<[1], [0], [0], [1], [0, 0, 1, 1], [], []>} : vector<8x128xf32>, vector<128x128xf32>, vector<8x128xf32> -> vector<8x128xf32>
    %45 = arith.addf %42, %44 : vector<8x128xf32>
    %46 = math.tanh %45 : vector<8x128xf32>
    %47 = arith.truncf %46 : vector<8x128xf32> to vector<8x128xbf16>
    %48 = arith.index_cast %c3_i32 : i32 to index
    %c0_28 = arith.constant 0 : index
    %c0_29 = arith.constant 0 : index
    %49 = vector.load %arg5[%48, %c0_28, %c0_29] : memref<8x8x128xbf16, #tpu.memory_space<vmem>>, vector<1x8x128xbf16>
    %50 = vector.shape_cast %49 : vector<1x8x128xbf16> to vector<8x128xbf16>
    %51 = vector.shape_cast %47 : vector<8x128xbf16> to vector<1x8x128xbf16>
    tpu.vector_store %arg5[%48, %c0_28, %c0_29], %51 {strides = array<i32>} : memref<8x8x128xbf16, #tpu.memory_space<vmem>>, vector<1x8x128xbf16>,
    %c4_i32 = arith.constant 4 : i32
    %52 = arith.index_cast %c4_i32 : i32 to index
    %c0_30 = arith.constant 0 : index
    %c0_31 = arith.constant 0 : index
    %53 = vector.load %arg2[%52, %c0_30, %c0_31] : memref<8x8x128xf32, #tpu.memory_space<vmem>>, vector<1x8x128xf32>
    %54 = vector.shape_cast %53 : vector<1x8x128xf32> to vector<8x128xf32>
    %c0_32 = arith.constant 0 : index
    %c0_33 = arith.constant 0 : index
    %55 = vector.load %arg4[%c0_32, %c0_33] : memref<128x128xf32, #tpu.memory_space<vmem>>, vector<128x128xf32>
    %cst_34 = arith.constant dense<0.000000e+00> : vector<8x128xf32>
    %56 = tpu.matmul %46, %55, %cst_34 {dimension_numbers = #tpu.dot_dimension_numbers<[1], [0], [0], [1], [0, 0, 1, 1], [], []>} : vector<8x128xf32>, vector<128x128xf32>, vector<8x128xf32> -> vector<8x128xf32>
    %57 = arith.addf %54, %56 : vector<8x128xf32>
    %58 = math.tanh %57 : vector<8x128xf32>
    %59 = arith.truncf %58 : vector<8x128xf32> to vector<8x128xbf16>
    %60 = arith.index_cast %c4_i32 : i32 to index
    %c0_35 = arith.constant 0 : index
    %c0_36 = arith.constant 0 : index
    %61 = vector.load %arg5[%60, %c0_35, %c0_36] : memref<8x8x128xbf16, #tpu.memory_space<vmem>>, vector<1x8x128xbf16>
    %62 = vector.shape_cast %61 : vector<1x8x128xbf16> to vector<8x128xbf16>
    %63 = vector.shape_cast %59 : vector<8x128xbf16> to vector<1x8x128xbf16>
    tpu.vector_store %arg5[%60, %c0_35, %c0_36], %63 {strides = array<i32>} : memref<8x8x128xbf16, #tpu.memory_space<vmem>>, vector<1x8x128xbf16>,
    %c5_i32 = arith.constant 5 : i32
    %64 = arith.index_cast %c5_i32 : i32 to index
    %c0_37 = arith.constant 0 : index
    %c0_38 = arith.constant 0 : index
    %65 = vector.load %arg2[%64, %c0_37, %c0_38] : memref<8x8x128xf32, #tpu.memory_space<vmem>>, vector<1x8x128xf32>
    %66 = vector.shape_cast %65 : vector<1x8x128xf32> to vector<8x128xf32>
    %c0_39 = arith.constant 0 : index
    %c0_40 = arith.constant 0 : index
    %67 = vector.load %arg4[%c0_39, %c0_40] : memref<128x128xf32, #tpu.memory_space<vmem>>, vector<128x128xf32>
    %cst_41 = arith.constant dense<0.000000e+00> : vector<8x128xf32>
    %68 = tpu.matmul %58, %67, %cst_41 {dimension_numbers = #tpu.dot_dimension_numbers<[1], [0], [0], [1], [0, 0, 1, 1], [], []>} : vector<8x128xf32>, vector<128x128xf32>, vector<8x128xf32> -> vector<8x128xf32>
    %69 = arith.addf %66, %68 : vector<8x128xf32>
    %70 = math.tanh %69 : vector<8x128xf32>
    %71 = arith.truncf %70 : vector<8x128xf32> to vector<8x128xbf16>
    %72 = arith.index_cast %c5_i32 : i32 to index
    %c0_42 = arith.constant 0 : index
    %c0_43 = arith.constant 0 : index
    %73 = vector.load %arg5[%72, %c0_42, %c0_43] : memref<8x8x128xbf16, #tpu.memory_space<vmem>>, vector<1x8x128xbf16>
    %74 = vector.shape_cast %73 : vector<1x8x128xbf16> to vector<8x128xbf16>
    %75 = vector.shape_cast %71 : vector<8x128xbf16> to vector<1x8x128xbf16>
    tpu.vector_store %arg5[%72, %c0_42, %c0_43], %75 {strides = array<i32>} : memref<8x8x128xbf16, #tpu.memory_space<vmem>>, vector<1x8x128xbf16>,
    %c6_i32 = arith.constant 6 : i32
    %76 = arith.index_cast %c6_i32 : i32 to index
    %c0_44 = arith.constant 0 : index
    %c0_45 = arith.constant 0 : index
    %77 = vector.load %arg2[%76, %c0_44, %c0_45] : memref<8x8x128xf32, #tpu.memory_space<vmem>>, vector<1x8x128xf32>
    %78 = vector.shape_cast %77 : vector<1x8x128xf32> to vector<8x128xf32>
    %c0_46 = arith.constant 0 : index
    %c0_47 = arith.constant 0 : index
    %79 = vector.load %arg4[%c0_46, %c0_47] : memref<128x128xf32, #tpu.memory_space<vmem>>, vector<128x128xf32>
    %cst_48 = arith.constant dense<0.000000e+00> : vector<8x128xf32>
    %80 = tpu.matmul %70, %79, %cst_48 {dimension_numbers = #tpu.dot_dimension_numbers<[1], [0], [0], [1], [0, 0, 1, 1], [], []>} : vector<8x128xf32>, vector<128x128xf32>, vector<8x128xf32> -> vector<8x128xf32>
    %81 = arith.addf %78, %80 : vector<8x128xf32>
    %82 = math.tanh %81 : vector<8x128xf32>
    %83 = arith.truncf %82 : vector<8x128xf32> to vector<8x128xbf16>
    %84 = arith.index_cast %c6_i32 : i32 to index
    %c0_49 = arith.constant 0 : index
    %c0_50 = arith.constant 0 : index
    %85 = vector.load %arg5[%84, %c0_49, %c0_50] : memref<8x8x128xbf16, #tpu.memory_space<vmem>>, vector<1x8x128xbf16>
    %86 = vector.shape_cast %85 : vector<1x8x128xbf16> to vector<8x128xbf16>
    %87 = vector.shape_cast %83 : vector<8x128xbf16> to vector<1x8x128xbf16>
    tpu.vector_store %arg5[%84, %c0_49, %c0_50], %87 {strides = array<i32>} : memref<8x8x128xbf16, #tpu.memory_space<vmem>>, vector<1x8x128xbf16>,
    %c7_i32 = arith.constant 7 : i32
    %88 = arith.index_cast %c7_i32 : i32 to index
    %c0_51 = arith.constant 0 : index
    %c0_52 = arith.constant 0 : index
    %89 = vector.load %arg2[%88, %c0_51, %c0_52] : memref<8x8x128xf32, #tpu.memory_space<vmem>>, vector<1x8x128xf32>
    %90 = vector.shape_cast %89 : vector<1x8x128xf32> to vector<8x128xf32>
    %c0_53 = arith.constant 0 : index
    %c0_54 = arith.constant 0 : index
    %91 = vector.load %arg4[%c0_53, %c0_54] : memref<128x128xf32, #tpu.memory_space<vmem>>, vector<128x128xf32>
    %cst_55 = arith.constant dense<0.000000e+00> : vector<8x128xf32>
    %92 = tpu.matmul %82, %91, %cst_55 {dimension_numbers = #tpu.dot_dimension_numbers<[1], [0], [0], [1], [0, 0, 1, 1], [], []>} : vector<8x128xf32>, vector<128x128xf32>, vector<8x128xf32> -> vector<8x128xf32>
    %93 = arith.addf %90, %92 : vector<8x128xf32>
    %94 = math.tanh %93 : vector<8x128xf32>
    %95 = arith.truncf %94 : vector<8x128xf32> to vector<8x128xbf16>
    %96 = arith.index_cast %c7_i32 : i32 to index
    %c0_56 = arith.constant 0 : index
    %c0_57 = arith.constant 0 : index
    %97 = vector.load %arg5[%96, %c0_56, %c0_57] : memref<8x8x128xbf16, #tpu.memory_space<vmem>>, vector<1x8x128xbf16>
    %98 = vector.shape_cast %97 : vector<1x8x128xbf16> to vector<8x128xbf16>
    %99 = vector.shape_cast %95 : vector<8x128xbf16> to vector<1x8x128xbf16>
    tpu.vector_store %arg5[%96, %c0_56, %c0_57], %99 {strides = array<i32>} : memref<8x8x128xbf16, #tpu.memory_space<vmem>>, vector<1x8x128xbf16>,
    %c8_i32 = arith.constant 8 : i32
    %c0_58 = arith.constant 0 : index
    %c0_59 = arith.constant 0 : index
    %100 = vector.load %arg7[%c0_58, %c0_59] : memref<8x128xf32, #tpu.memory_space<vmem>>, vector<8x128xf32>
    tpu.vector_store %arg7[%c0_58, %c0_59], %94 {strides = array<i32>} : memref<8x128xf32, #tpu.memory_space<vmem>>, vector<8x128xf32>,
    %c0_60 = arith.constant 0 : index
    %c0_61 = arith.constant 0 : index
    %101 = vector.load %arg6[%c0_60, %c0_61] : memref<8x128xf32, #tpu.memory_space<vmem>>, vector<8x128xf32>
    tpu.vector_store %arg6[%c0_60, %c0_61], %94 {strides = array<i32>} : memref<8x128xf32, #tpu.memory_space<vmem>>, vector<8x128xf32>,
    return
  }
  func.func @transform_0(%arg0: i32, %arg1: i32) -> (i32, i32, i32) {
    %c0_i32 = arith.constant 0 : i32
    %c0_i32_0 = arith.constant 0 : i32
    return %arg1, %arg0, %c0_i32 : i32, i32, i32
  }
  func.func @transform_1(%arg0: i32, %arg1: i32) -> (i32, i32) {
    %c0_i32 = arith.constant 0 : i32
    %c0_i32_0 = arith.constant 0 : i32
    return %arg0, %c0_i32 : i32, i32
  }
  func.func @transform_2(%arg0: i32, %arg1: i32) -> (i32, i32) {
    %c0_i32 = arith.constant 0 : i32
    %c0_i32_0 = arith.constant 0 : i32
    %c0_i32_1 = arith.constant 0 : i32
    return %c0_i32, %c0_i32_0 : i32, i32
  }
  func.func @transform_3(%arg0: i32, %arg1: i32) -> (i32, i32, i32) {
    %c0_i32 = arith.constant 0 : i32
    %c0_i32_0 = arith.constant 0 : i32
    return %arg1, %arg0, %c0_i32 : i32, i32, i32
  }
  func.func @transform_4(%arg0: i32, %arg1: i32) -> (i32, i32) {
    %c0_i32 = arith.constant 0 : i32
    %c0_i32_0 = arith.constant 0 : i32
    return %arg0, %c0_i32 : i32, i32
  }
}

</mosaic_0001>

<llo_original>
// kernel: tpu_custom_call.1
$region0: #{tpu_custom_call.1}
  #allocation0 [shape = 'u32[]', space=smem, size = 0x4, offset = 0x4, fixed_abs, tag = 'smem constant byte address 0x4 - core index']
  #allocation1 [shape = 'u32[144,128]{1,0:T(1,128)}', space=vmem, size = 0x12000, scoped, tag = 'internal scratch']
  #allocation2 [shape = 'f32[8,128]{1,0:T(8,128)}', space=vmem, size = 0x1000, scoped, tag = 'scratch operand']
  %s0 = inlined_call_operand.hbm [shape: f32[8,8,128], index: 0, kind: input, shape index: {}]
  %s1 = inlined_call_operand.hbm [shape: f32[8,128], index: 1, kind: input, shape index: {}]
  %s2 = inlined_call_operand.hbm [shape: f32[128,128], index: 2, kind: input, shape index: {}]
  %s3 = inlined_call_operand.hbm [shape: bf16[8,8,128], index: 3, kind: output, shape index: {0}]
  %s4 = inlined_call_operand.hbm [shape: f32[8,128], index: 4, kind: output, shape index: {1}]
  %5 = xla_tuple %s3, %s4
  %s6 = sld [smem:[#allocation0]]
  $region46: #{tpu_custom_call.1} parent=0
    _
  %s8 = ssub.s32 1, %s6
  %s9 = scalar_select 0, %s8, %s6
  $region1: #{tpu_custom_call.1} parent=0
    #allocation3 [shape = 'u8[32768]{0}', space=vmem, size = 0x8000, scoped, tag = 'input window, operand 0, single buffered']
    #allocation4 [shape = 's32[1]{0}', space=sflag, size = 0x4, scoped, tag = 'scoped memory for tpu_custom_call.1']
    #allocation5 [shape = 's32[1]{0}', space=sflag, size = 0x4, scoped, tag = 'scoped memory for tpu_custom_call.1']
    #allocation6 [shape = 'u8[4096]{0}', space=vmem, size = 0x1000, scoped, tag = 'input window, operand 1, single buffered']
    #allocation7 [shape = 's32[1]{0}', space=sflag, size = 0x4, scoped, tag = 'scoped memory for tpu_custom_call.1']
    #allocation8 [shape = 'u8[65536]{0}', space=vmem, size = 0x10000, scoped, tag = 'input window, operand 2, single buffered']
    #allocation9 [shape = 'u8[16384]{0}', space=vmem, size = 0x4000, scoped, tag = 'output window, operand 0, single buffered']
    #allocation10 [shape = 'u8[4096]{0}', space=vmem, size = 0x1000, scoped, tag = 'output window, operand 1, single buffered']
    #allocation11 [shape = 's32[1]{0}', space=sflag, size = 0x4, scoped, tag = 'scoped memory for tpu_custom_call.1']
    %10 = vsyncpa [#allocation4], 0
    %11 = vsyncpa [#allocation7], 0
    %12 = vsyncpa [#allocation5], 0
    %13 = vsyncpa [#allocation11], 0
    // Predicated region
    $region2: #{tpu_custom_call.1} parent=1 // pred_check
      _
    $region3: #{tpu_custom_call.1} parent=1 // pred_check_branch
      %15 = sbr.rel (0) target = $region5
    $region4: #{tpu_custom_call.1} parent=1 // pred_region
      %s17 = ssub.s32 1024, 1024
      %18 = vsyncadd [#allocation4], %s17
      %s19 = sshll.u32 [#allocation3], 4
      %s20 = int_to_ptr.vmem [resolvable:$true] %s19
      %25 = dma.hbm_to_vmem [thread:$0]  %s0, 1024, %s20, [#allocation4], 128, 128, 8
    $region5: #{tpu_custom_call.1} parent=1 // pred_fallthru
      _
    // Predicated region
    $region6: #{tpu_custom_call.1} parent=1 // pred_check
      _
    $region7: #{tpu_custom_call.1} parent=1 // pred_check_branch
      %27 = sbr.rel (0) target = $region9
    $region8: #{tpu_custom_call.1} parent=1 // pred_region
      %s29 = ssub.s32 128, 128
      %30 = vsyncadd [#allocation7], %s29
      %s32 = sshll.u32 [#allocation6], 4
      %s33 = int_to_ptr.vmem [resolvable:$true] %s32
      %35 = dma.hbm_to_vmem [thread:$0]  %s1, 128, %s33, [#allocation7]
    $region9: #{tpu_custom_call.1} parent=1 // pred_fallthru
      _
    // Predicated region
    $region10: #{tpu_custom_call.1} parent=1 // pred_check
      _
    $region11: #{tpu_custom_call.1} parent=1 // pred_check_branch
      %37 = sbr.rel (0) target = $region13
    $region12: #{tpu_custom_call.1} parent=1 // pred_region
      %s39 = ssub.s32 2048, 2048
      %40 = vsyncadd [#allocation7], %s39
      %s41 = sshll.u32 [#allocation8], 4
      %s42 = int_to_ptr.vmem [resolvable:$true] %s41
      %47 = dma.hbm_to_vmem [thread:$0]  %s2, 2048, %s42, [#allocation7], 128, 128, 8
    $region13: #{tpu_custom_call.1} parent=1 // pred_fallthru
      _
    // Predicated region
    $region14: #{tpu_custom_call.1} parent=1 // pred_check
      _
    $region15: #{tpu_custom_call.1} parent=1 // pred_check_branch
      %49 = sbr.rel (0) target = $region17
    $region16: #{tpu_custom_call.1} parent=1 // pred_region
      %50 = dma.done [#allocation4], 1024
    $region17: #{tpu_custom_call.1} parent=1 // pred_fallthru
      _
    // Predicated region
    $region18: #{tpu_custom_call.1} parent=1 // pred_check
      _
    $region19: #{tpu_custom_call.1} parent=1 // pred_check_branch
      %52 = sbr.rel (0) target = $region21
    $region20: #{tpu_custom_call.1} parent=1 // pred_region
      %53 = dma.done [#allocation7], 128
    $region21: #{tpu_custom_call.1} parent=1 // pred_fallthru
      _
    // Predicated region
    $region22: #{tpu_custom_call.1} parent=1 // pred_check
      _
    $region23: #{tpu_custom_call.1} parent=1 // pred_check_branch
      %55 = sbr.rel (0) target = $region25
    $region24: #{tpu_custom_call.1} parent=1 // pred_region
      %56 = dma.done [#allocation7], 2048
    $region25: #{tpu_custom_call.1} parent=1 // pred_fallthru
      _
    %p57 = scmp.eq.s32.totalorder 0, 0
    // Predicated region
    $region26: #{tpu_custom_call.1} parent=1 // pred_check
      %p58 = pneg %p57
    $region27: #{tpu_custom_call.1} parent=1 // pred_check_branch
      %60 = sbr.rel (%p58) target = $region29
    $region28: #{tpu_custom_call.1} parent=1 // pred_region
      %v61 = vld [vmem:[#allocation6] sm:$0xff]
      %62 = vst [vmem:[#allocation2] sm:$0xff] %v61
    $region29: #{tpu_custom_call.1} parent=1 // pred_fallthru
      _
    %v63 = vld [vmem:[#allocation2] sm:$0xff]
    %v64 = vld [vmem:[#allocation3] sm:$0xff]
    %v65 = vld [vmem:[#allocation8] sm:$0xff]
    %v66 = vld [vmem:[#allocation8 + $0x8] sm:$0xff]
    %v67 = vld [vmem:[#allocation8 + $0x10] sm:$0xff]
    %v68 = vld [vmem:[#allocation8 + $0x18] sm:$0xff]
    %v69 = vld [vmem:[#allocation8 + $0x20] sm:$0xff]
    %v70 = vld [vmem:[#allocation8 + $0x28] sm:$0xff]
    %v71 = vld [vmem:[#allocation8 + $0x30] sm:$0xff]
    %v72 = vld [vmem:[#allocation8 + $0x38] sm:$0xff]
    %v73 = vld [vmem:[#allocation8 + $0x40] sm:$0xff]
    %v74 = vld [vmem:[#allocation8 + $0x48] sm:$0xff]
    %v75 = vld [vmem:[#allocation8 + $0x50] sm:$0xff]
    %v76 = vld [vmem:[#allocation8 + $0x58] sm:$0xff]
    %v77 = vld [vmem:[#allocation8 + $0x60] sm:$0xff]
    %v78 = vld [vmem:[#allocation8 + $0x68] sm:$0xff]
    %v79 = vld [vmem:[#allocation8 + $0x70] sm:$0xff]
    %v80 = vld [vmem:[#allocation8 + $0x78] sm:$0xff]
    %81 = vmatprep.subr.mxu0 0.0
    %82 = vmatpush1.msra.mxu0 %v80
    %83 = vmatprep.subr.mxu0 0.0
    %84 = vmatpush1.msra.mxu0 %v79
    %85 = vmatprep.subr.mxu0 0.0
    %86 = vmatpush1.msra.mxu0 %v78
    %87 = vmatprep.subr.mxu0 0.0
    %88 = vmatpush1.msra.mxu0 %v77
    %89 = vmatprep.subr.mxu0 0.0
    %90 = vmatpush1.msra.mxu0 %v76
    %91 = vmatprep.subr.mxu0 0.0
    %92 = vmatpush1.msra.mxu0 %v75
    %93 = vmatprep.subr.mxu0 0.0
    %94 = vmatpush1.msra.mxu0 %v74
    %95 = vmatprep.subr.mxu0 0.0
    %96 = vmatpush1.msra.mxu0 %v73
    %97 = vmatprep.subr.mxu0 0.0
    %98 = vmatpush1.msra.mxu0 %v72
    %99 = vmatprep.subr.mxu0 0.0
    %100 = vmatpush1.msra.mxu0 %v71
    %101 = vmatprep.subr.mxu0 0.0
    %102 = vmatpush1.msra.mxu0 %v70
    %103 = vmatprep.subr.mxu0 0.0
    %104 = vmatpush1.msra.mxu0 %v69
    %105 = vmatprep.subr.mxu0 0.0
    %106 = vmatpush1.msra.mxu0 %v68
    %107 = vmatprep.subr.mxu0 0.0
    %108 = vmatpush1.msra.mxu0 %v67
    %109 = vmatprep.subr.mxu0 0.0
    %110 = vmatpush1.msra.mxu0 %v66
    %111 = vmatprep.subr.mxu0 0.0
    %112 = vmatpush1.msra.mxu0 %v65
    %113 = vmatprep.subr.mxu0 0.0
    %114 = vmatpush2.msra.mxu0 0.0
    %115 = vmatprep.subr.mxu0 0.0
    %116 = vmatpush2.msra.mxu0 0.0
    %117 = vmatprep.subr.mxu0 0.0
    %118 = vmatpush2.msra.mxu0 0.0
    %119 = vmatprep.subr.mxu0 0.0
    %120 = vmatpush2.msra.mxu0 0.0
    %121 = vmatprep.subr.mxu0 0.0
    %122 = vmatpush2.msra.mxu0 0.0
    %123 = vmatprep.subr.mxu0 0.0
    %124 = vmatpush2.msra.mxu0 0.0
    %125 = vmatprep.subr.mxu0 0.0
    %126 = vmatpush2.msra.mxu0 0.0
    %127 = vmatprep.subr.mxu0 0.0
    %128 = vmatpush2.msra.mxu0 0.0
    %129 = vmatprep.subr.mxu0 0.0
    %130 = vmatpush2.msra.mxu0 0.0
    %131 = vmatprep.subr.mxu0 0.0
    %132 = vmatpush2.msra.mxu0 0.0
    %133 = vmatprep.subr.mxu0 0.0
    %134 = vmatpush2.msra.mxu0 0.0
    %135 = vmatprep.subr.mxu0 0.0
    %136 = vmatpush2.msra.mxu0 0.0
    %137 = vmatprep.subr.mxu0 0.0
    %138 = vmatpush2.msra.mxu0 0.0
    %139 = vmatprep.subr.mxu0 0.0
    %140 = vmatpush2.msra.mxu0 0.0
    %141 = vmatprep.subr.mxu0 0.0
    %142 = vmatpush2.msra.mxu0 0.0
    %143 = vmatprep.subr.mxu0 0.0
    %144 = vmatpush2.msra.mxu0 0.0
    %145 = vmatprep.mubr.f32.mxu0 0.0
    %146 = vmatmul.mubr.f32.gmra.mxu0 %v63
    %v147 = vpop.f32.mrf.mxu0
    %v148 = vadd.f32 0.0, %v147
    %v149 = vpop.f32.mrf.mxu0
    %150 = vdwg.mxu0
    %v151 = vadd.f32 %v64, %v148
    %v152 = vtanh.pop %v151
    %v153 = vpack.c.bf16 %v152, %v152
    %154 = vst [vmem:[#allocation9] sm:$0xf] %v153
    %s155 = scalar_lea.vmem [#allocation3], 8
    %v156 = vld [vmem:[%s155] sm:$0xff]
    %v157 = vld [vmem:[#allocation8] sm:$0xff]
    %v158 = vld [vmem:[#allocation8 + $0x8] sm:$0xff]
    %v159 = vld [vmem:[#allocation8 + $0x10] sm:$0xff]
    %v160 = vld [vmem:[#allocation8 + $0x18] sm:$0xff]
    %v161 = vld [vmem:[#allocation8 + $0x20] sm:$0xff]
    %v162 = vld [vmem:[#allocation8 + $0x28] sm:$0xff]
    %v163 = vld [vmem:[#allocation8 + $0x30] sm:$0xff]
    %v164 = vld [vmem:[#allocation8 + $0x38] sm:$0xff]
    %v165 = vld [vmem:[#allocation8 + $0x40] sm:$0xff]
    %v166 = vld [vmem:[#allocation8 + $0x48] sm:$0xff]
    %v167 = vld [vmem:[#allocation8 + $0x50] sm:$0xff]
    %v168 = vld [vmem:[#allocation8 + $0x58] sm:$0xff]
    %v169 = vld [vmem:[#allocation8 + $0x60] sm:$0xff]
    %v170 = vld [vmem:[#allocation8 + $0x68] sm:$0xff]
    %v171 = vld [vmem:[#allocation8 + $0x70] sm:$0xff]
    %v172 = vld [vmem:[#allocation8 + $0x78] sm:$0xff]
    %173 = vmatprep.subr.mxu0 0.0
    %174 = vmatpush1.msra.mxu0 %v172
    %175 = vmatprep.subr.mxu0 0.0
    %176 = vmatpush1.msra.mxu0 %v171
    %177 = vmatprep.subr.mxu0 0.0
    %178 = vmatpush1.msra.mxu0 %v170
    %179 = vmatprep.subr.mxu0 0.0
    %180 = vmatpush1.msra.mxu0 %v169
    %181 = vmatprep.subr.mxu0 0.0
    %182 = vmatpush1.msra.mxu0 %v168
    %183 = vmatprep.subr.mxu0 0.0
    %184 = vmatpush1.msra.mxu0 %v167
    %185 = vmatprep.subr.mxu0 0.0
    %186 = vmatpush1.msra.mxu0 %v166
    %187 = vmatprep.subr.mxu0 0.0
    %188 = vmatpush1.msra.mxu0 %v165
    %189 = vmatprep.subr.mxu0 0.0
    %190 = vmatpush1.msra.mxu0 %v164
    %191 = vmatprep.subr.mxu0 0.0
    %192 = vmatpush1.msra.mxu0 %v163
    %193 = vmatprep.subr.mxu0 0.0
    %194 = vmatpush1.msra.mxu0 %v162
    %195 = vmatprep.subr.mxu0 0.0
    %196 = vmatpush1.msra.mxu0 %v161
    %197 = vmatprep.subr.mxu0 0.0
    %198 = vmatpush1.msra.mxu0 %v160
    %199 = vmatprep.subr.mxu0 0.0
    %200 = vmatpush1.msra.mxu0 %v159
    %201 = vmatprep.subr.mxu0 0.0
    %202 = vmatpush1.msra.mxu0 %v158
    %203 = vmatprep.subr.mxu0 0.0
    %204 = vmatpush1.msra.mxu0 %v157
    %205 = vmatprep.subr.mxu0 0.0
    %206 = vmatpush2.msra.mxu0 0.0
    %207 = vmatprep.subr.mxu0 0.0
    %208 = vmatpush2.msra.mxu0 0.0
    %209 = vmatprep.subr.mxu0 0.0
    %210 = vmatpush2.msra.mxu0 0.0
    %211 = vmatprep.subr.mxu0 0.0
    %212 = vmatpush2.msra.mxu0 0.0
    %213 = vmatprep.subr.mxu0 0.0
    %214 = vmatpush2.msra.mxu0 0.0
    %215 = vmatprep.subr.mxu0 0.0
    %216 = vmatpush2.msra.mxu0 0.0
    %217 = vmatprep.subr.mxu0 0.0
    %218 = vmatpush2.msra.mxu0 0.0
    %219 = vmatprep.subr.mxu0 0.0
    %220 = vmatpush2.msra.mxu0 0.0
    %221 = vmatprep.subr.mxu0 0.0
    %222 = vmatpush2.msra.mxu0 0.0
    %223 = vmatprep.subr.mxu0 0.0
    %224 = vmatpush2.msra.mxu0 0.0
    %225 = vmatprep.subr.mxu0 0.0
    %226 = vmatpush2.msra.mxu0 0.0
    %227 = vmatprep.subr.mxu0 0.0
    %228 = vmatpush2.msra.mxu0 0.0
    %229 = vmatprep.subr.mxu0 0.0
    %230 = vmatpush2.msra.mxu0 0.0
    %231 = vmatprep.subr.mxu0 0.0
    %232 = vmatpush2.msra.mxu0 0.0
    %233 = vmatprep.subr.mxu0 0.0
    %234 = vmatpush2.msra.mxu0 0.0
    %235 = vmatprep.subr.mxu0 0.0
    %236 = vmatpush2.msra.mxu0 0.0
    %237 = vmatprep.mubr.f32.mxu0 0.0
    %238 = vmatmul.mubr.f32.gmra.mxu0 %v152
    %v239 = vpop.f32.mrf.mxu0
    %v240 = vadd.f32 0.0, %v239
    %v241 = vpop.f32.mrf.mxu0
    %242 = vdwg.mxu0
    %v243 = vadd.f32 %v156, %v240
    %v244 = vtanh.pop %v243
    %v245 = vpack.c.bf16 %v244, %v244
    %s246 = scalar_lea.vmem [#allocation9], 4
    %247 = vst [vmem:[%s246] sm:$0xf] %v245
    %s248 = scalar_lea.vmem [#allocation3], 16
    %v249 = vld [vmem:[%s248] sm:$0xff]
    %v250 = vld [vmem:[#allocation8] sm:$0xff]
    %v251 = vld [vmem:[#allocation8 + $0x8] sm:$0xff]
    %v252 = vld [vmem:[#allocation8 + $0x10] sm:$0xff]
    %v253 = vld [vmem:[#allocation8 + $0x18] sm:$0xff]
    %v254 = vld [vmem:[#allocation8 + $0x20] sm:$0xff]
    %v255 = vld [vmem:[#allocation8 + $0x28] sm:$0xff]
    %v256 = vld [vmem:[#allocation8 + $0x30] sm:$0xff]
    %v257 = vld [vmem:[#allocation8 + $0x38] sm:$0xff]
    %v258 = vld [vmem:[#allocation8 + $0x40] sm:$0xff]
    %v259 = vld [vmem:[#allocation8 + $0x48] sm:$0xff]
    %v260 = vld [vmem:[#allocation8 + $0x50] sm:$0xff]
    %v261 = vld [vmem:[#allocation8 + $0x58] sm:$0xff]
    %v262 = vld [vmem:[#allocation8 + $0x60] sm:$0xff]
    %v263 = vld [vmem:[#allocation8 + $0x68] sm:$0xff]
    %v264 = vld [vmem:[#allocation8 + $0x70] sm:$0xff]
    %v265 = vld [vmem:[#allocation8 + $0x78] sm:$0xff]
    %266 = vmatprep.subr.mxu0 0.0
    %267 = vmatpush1.msra.mxu0 %v265
    %268 = vmatprep.subr.mxu0 0.0
    %269 = vmatpush1.msra.mxu0 %v264
    %270 = vmatprep.subr.mxu0 0.0
    %271 = vmatpush1.msra.mxu0 %v263
    %272 = vmatprep.subr.mxu0 0.0
    %273 = vmatpush1.msra.mxu0 %v262
    %274 = vmatprep.subr.mxu0 0.0
    %275 = vmatpush1.msra.mxu0 %v261
    %276 = vmatprep.subr.mxu0 0.0
    %277 = vmatpush1.msra.mxu0 %v260
    %278 = vmatprep.subr.mxu0 0.0
    %279 = vmatpush1.msra.mxu0 %v259
    %280 = vmatprep.subr.mxu0 0.0
    %281 = vmatpush1.msra.mxu0 %v258
    %282 = vmatprep.subr.mxu0 0.0
    %283 = vmatpush1.msra.mxu0 %v257
    %284 = vmatprep.subr.mxu0 0.0
    %285 = vmatpush1.msra.mxu0 %v256
    %286 = vmatprep.subr.mxu0 0.0
    %287 = vmatpush1.msra.mxu0 %v255
    %288 = vmatprep.subr.mxu0 0.0
    %289 = vmatpush1.msra.mxu0 %v254
    %290 = vmatprep.subr.mxu0 0.0
    %291 = vmatpush1.msra.mxu0 %v253
    %292 = vmatprep.subr.mxu0 0.0
    %293 = vmatpush1.msra.mxu0 %v252
    %294 = vmatprep.subr.mxu0 0.0
    %295 = vmatpush1.msra.mxu0 %v251
    %296 = vmatprep.subr.mxu0 0.0
    %297 = vmatpush1.msra.mxu0 %v250
    %298 = vmatprep.subr.mxu0 0.0
    %299 = vmatpush2.msra.mxu0 0.0
    %300 = vmatprep.subr.mxu0 0.0
    %301 = vmatpush2.msra.mxu0 0.0
    %302 = vmatprep.subr.mxu0 0.0
    %303 = vmatpush2.msra.mxu0 0.0
    %304 = vmatprep.subr.mxu0 0.0
    %305 = vmatpush2.msra.mxu0 0.0
    %306 = vmatprep.subr.mxu0 0.0
    %307 = vmatpush2.msra.mxu0 0.0
    %308 = vmatprep.subr.mxu0 0.0
    %309 = vmatpush2.msra.mxu0 0.0
    %310 = vmatprep.subr.mxu0 0.0
    %311 = vmatpush2.msra.mxu0 0.0
    %312 = vmatprep.subr.mxu0 0.0
    %313 = vmatpush2.msra.mxu0 0.0
    %314 = vmatprep.subr.mxu0 0.0
    %315 = vmatpush2.msra.mxu0 0.0
    %316 = vmatprep.subr.mxu0 0.0
    %317 = vmatpush2.msra.mxu0 0.0
    %318 = vmatprep.subr.mxu0 0.0
    %319 = vmatpush2.msra.mxu0 0.0
    %320 = vmatprep.subr.mxu0 0.0
    %321 = vmatpush2.msra.mxu0 0.0
    %322 = vmatprep.subr.mxu0 0.0
    %323 = vmatpush2.msra.mxu0 0.0
    %324 = vmatprep.subr.mxu0 0.0
    %325 = vmatpush2.msra.mxu0 0.0
    %326 = vmatprep.subr.mxu0 0.0
    %327 = vmatpush2.msra.mxu0 0.0
    %328 = vmatprep.subr.mxu0 0.0
    %329 = vmatpush2.msra.mxu0 0.0
    %330 = vmatprep.mubr.f32.mxu0 0.0
    %331 = vmatmul.mubr.f32.gmra.mxu0 %v244
    %v332 = vpop.f32.mrf.mxu0
    %v333 = vadd.f32 0.0, %v332
    %v334 = vpop.f32.mrf.mxu0
    %335 = vdwg.mxu0
    %v336 = vadd.f32 %v249, %v333
    %v337 = vtanh.pop %v336
    %v338 = vpack.c.bf16 %v337, %v337
    %s339 = scalar_lea.vmem [#allocation9], 8
    %340 = vst [vmem:[%s339] sm:$0xf] %v338
    %s341 = scalar_lea.vmem [#allocation3], 24
    %v342 = vld [vmem:[%s341] sm:$0xff]
    %v343 = vld [vmem:[#allocation8] sm:$0xff]
    %v344 = vld [vmem:[#allocation8 + $0x8] sm:$0xff]
    %v345 = vld [vmem:[#allocation8 + $0x10] sm:$0xff]
    %v346 = vld [vmem:[#allocation8 + $0x18] sm:$0xff]
    %v347 = vld [vmem:[#allocation8 + $0x20] sm:$0xff]
    %v348 = vld [vmem:[#allocation8 + $0x28] sm:$0xff]
    %v349 = vld [vmem:[#allocation8 + $0x30] sm:$0xff]
    %v350 = vld [vmem:[#allocation8 + $0x38] sm:$0xff]
    %v351 = vld [vmem:[#allocation8 + $0x40] sm:$0xff]
    %v352 = vld [vmem:[#allocation8 + $0x48] sm:$0xff]
    %v353 = vld [vmem:[#allocation8 + $0x50] sm:$0xff]
    %v354 = vld [vmem:[#allocation8 + $0x58] sm:$0xff]
    %v355 = vld [vmem:[#allocation8 + $0x60] sm:$0xff]
    %v356 = vld [vmem:[#allocation8 + $0x68] sm:$0xff]
    %v357 = vld [vmem:[#allocation8 + $0x70] sm:$0xff]
    %v358 = vld [vmem:[#allocation8 + $0x78] sm:$0xff]
    %359 = vmatprep.subr.mxu0 0.0
    %360 = vmatpush1.msra.mxu0 %v358
    %361 = vmatprep.subr.mxu0 0.0
    %362 = vmatpush1.msra.mxu0 %v357
    %363 = vmatprep.subr.mxu0 0.0
    %364 = vmatpush1.msra.mxu0 %v356
    %365 = vmatprep.subr.mxu0 0.0
    %366 = vmatpush1.msra.mxu0 %v355
    %367 = vmatprep.subr.mxu0 0.0
    %368 = vmatpush1.msra.mxu0 %v354
    %369 = vmatprep.subr.mxu0 0.0
    %370 = vmatpush1.msra.mxu0 %v353
    %371 = vmatprep.subr.mxu0 0.0
    %372 = vmatpush1.msra.mxu0 %v352
    %373 = vmatprep.subr.mxu0 0.0
    %374 = vmatpush1.msra.mxu0 %v351
    %375 = vmatprep.subr.mxu0 0.0
    %376 = vmatpush1.msra.mxu0 %v350
    %377 = vmatprep.subr.mxu0 0.0
    %378 = vmatpush1.msra.mxu0 %v349
    %379 = vmatprep.subr.mxu0 0.0
    %380 = vmatpush1.msra.mxu0 %v348
    %381 = vmatprep.subr.mxu0 0.0
    %382 = vmatpush1.msra.mxu0 %v347
    %383 = vmatprep.subr.mxu0 0.0
    %384 = vmatpush1.msra.mxu0 %v346
    %385 = vmatprep.subr.mxu0 0.0
    %386 = vmatpush1.msra.mxu0 %v345
    %387 = vmatprep.subr.mxu0 0.0
    %388 = vmatpush1.msra.mxu0 %v344
    %389 = vmatprep.subr.mxu0 0.0
    %390 = vmatpush1.msra.mxu0 %v343
    %391 = vmatprep.subr.mxu0 0.0
    %392 = vmatpush2.msra.mxu0 0.0
    %393 = vmatprep.subr.mxu0 0.0
    %394 = vmatpush2.msra.mxu0 0.0
    %395 = vmatprep.subr.mxu0 0.0
    %396 = vmatpush2.msra.mxu0 0.0
    %397 = vmatprep.subr.mxu0 0.0
    %398 = vmatpush2.msra.mxu0 0.0
    %399 = vmatprep.subr.mxu0 0.0
    %400 = vmatpush2.msra.mxu0 0.0
    %401 = vmatprep.subr.mxu0 0.0
    %402 = vmatpush2.msra.mxu0 0.0
    %403 = vmatprep.subr.mxu0 0.0
    %404 = vmatpush2.msra.mxu0 0.0
    %405 = vmatprep.subr.mxu0 0.0
    %406 = vmatpush2.msra.mxu0 0.0
    %407 = vmatprep.subr.mxu0 0.0
    %408 = vmatpush2.msra.mxu0 0.0
    %409 = vmatprep.subr.mxu0 0.0
    %410 = vmatpush2.msra.mxu0 0.0
    %411 = vmatprep.subr.mxu0 0.0
    %412 = vmatpush2.msra.mxu0 0.0
    %413 = vmatprep.subr.mxu0 0.0
    %414 = vmatpush2.msra.mxu0 0.0
    %415 = vmatprep.subr.mxu0 0.0
    %416 = vmatpush2.msra.mxu0 0.0
    %417 = vmatprep.subr.mxu0 0.0
    %418 = vmatpush2.msra.mxu0 0.0
    %419 = vmatprep.subr.mxu0 0.0
    %420 = vmatpush2.msra.mxu0 0.0
    %421 = vmatprep.subr.mxu0 0.0
    %422 = vmatpush2.msra.mxu0 0.0
    %423 = vmatprep.mubr.f32.mxu0 0.0
    %424 = vmatmul.mubr.f32.gmra.mxu0 %v337
    %v425 = vpop.f32.mrf.mxu0
    %v426 = vadd.f32 0.0, %v425
    %v427 = vpop.f32.mrf.mxu0
    %428 = vdwg.mxu0
    %v429 = vadd.f32 %v342, %v426
    %v430 = vtanh.pop %v429
    %v431 = vpack.c.bf16 %v430, %v430
    %s432 = scalar_lea.vmem [#allocation9], 12
    %433 = vst [vmem:[%s432] sm:$0xf] %v431
    %s434 = scalar_lea.vmem [#allocation3], 32
    %v435 = vld [vmem:[%s434] sm:$0xff]
    %v436 = vld [vmem:[#allocation8] sm:$0xff]
    %v437 = vld [vmem:[#allocation8 + $0x8] sm:$0xff]
    %v438 = vld [vmem:[#allocation8 + $0x10] sm:$0xff]
    %v439 = vld [vmem:[#allocation8 + $0x18] sm:$0xff]
    %v440 = vld [vmem:[#allocation8 + $0x20] sm:$0xff]
    %v441 = vld [vmem:[#allocation8 + $0x28] sm:$0xff]
    %v442 = vld [vmem:[#allocation8 + $0x30] sm:$0xff]
    %v443 = vld [vmem:[#allocation8 + $0x38] sm:$0xff]
    %v444 = vld [vmem:[#allocation8 + $0x40] sm:$0xff]
    %v445 = vld [vmem:[#allocation8 + $0x48] sm:$0xff]
    %v446 = vld [vmem:[#allocation8 + $0x50] sm:$0xff]
    %v447 = vld [vmem:[#allocation8 + $0x58] sm:$0xff]
    %v448 = vld [vmem:[#allocation8 + $0x60] sm:$0xff]
    %v449 = vld [vmem:[#allocation8 + $0x68] sm:$0xff]
    %v450 = vld [vmem:[#allocation8 + $0x70] sm:$0xff]
    %v451 = vld [vmem:[#allocation8 + $0x78] sm:$0xff]
    %452 = vmatprep.subr.mxu0 0.0
    %453 = vmatpush1.msra.mxu0 %v451
    %454 = vmatprep.subr.mxu0 0.0
    %455 = vmatpush1.msra.mxu0 %v450
    %456 = vmatprep.subr.mxu0 0.0
    %457 = vmatpush1.msra.mxu0 %v449
    %458 = vmatprep.subr.mxu0 0.0
    %459 = vmatpush1.msra.mxu0 %v448
    %460 = vmatprep.subr.mxu0 0.0
    %461 = vmatpush1.msra.mxu0 %v447
    %462 = vmatprep.subr.mxu0 0.0
    %463 = vmatpush1.msra.mxu0 %v446
    %464 = vmatprep.subr.mxu0 0.0
    %465 = vmatpush1.msra.mxu0 %v445
    %466 = vmatprep.subr.mxu0 0.0
    %467 = vmatpush1.msra.mxu0 %v444
    %468 = vmatprep.subr.mxu0 0.0
    %469 = vmatpush1.msra.mxu0 %v443
    %470 = vmatprep.subr.mxu0 0.0
    %471 = vmatpush1.msra.mxu0 %v442
    %472 = vmatprep.subr.mxu0 0.0
    %473 = vmatpush1.msra.mxu0 %v441
    %474 = vmatprep.subr.mxu0 0.0
    %475 = vmatpush1.msra.mxu0 %v440
    %476 = vmatprep.subr.mxu0 0.0
    %477 = vmatpush1.msra.mxu0 %v439
    %478 = vmatprep.subr.mxu0 0.0
    %479 = vmatpush1.msra.mxu0 %v438
    %480 = vmatprep.subr.mxu0 0.0
    %481 = vmatpush1.msra.mxu0 %v437
    %482 = vmatprep.subr.mxu0 0.0
    %483 = vmatpush1.msra.mxu0 %v436
    %484 = vmatprep.subr.mxu0 0.0
    %485 = vmatpush2.msra.mxu0 0.0
    %486 = vmatprep.subr.mxu0 0.0
    %487 = vmatpush2.msra.mxu0 0.0
    %488 = vmatprep.subr.mxu0 0.0
    %489 = vmatpush2.msra.mxu0 0.0
    %490 = vmatprep.subr.mxu0 0.0
    %491 = vmatpush2.msra.mxu0 0.0
    %492 = vmatprep.subr.mxu0 0.0
    %493 = vmatpush2.msra.mxu0 0.0
    %494 = vmatprep.subr.mxu0 0.0
    %495 = vmatpush2.msra.mxu0 0.0
    %496 = vmatprep.subr.mxu0 0.0
    %497 = vmatpush2.msra.mxu0 0.0
    %498 = vmatprep.subr.mxu0 0.0
    %499 = vmatpush2.msra.mxu0 0.0
    %500 = vmatprep.subr.mxu0 0.0
    %501 = vmatpush2.msra.mxu0 0.0
    %502 = vmatprep.subr.mxu0 0.0
    %503 = vmatpush2.msra.mxu0 0.0
    %504 = vmatprep.subr.mxu0 0.0
    %505 = vmatpush2.msra.mxu0 0.0
    %506 = vmatprep.subr.mxu0 0.0
    %507 = vmatpush2.msra.mxu0 0.0
    %508 = vmatprep.subr.mxu0 0.0
    %509 = vmatpush2.msra.mxu0 0.0
    %510 = vmatprep.subr.mxu0 0.0
    %511 = vmatpush2.msra.mxu0 0.0
    %512 = vmatprep.subr.mxu0 0.0
    %513 = vmatpush2.msra.mxu0 0.0
    %514 = vmatprep.subr.mxu0 0.0
    %515 = vmatpush2.msra.mxu0 0.0
    %516 = vmatprep.mubr.f32.mxu0 0.0
    %517 = vmatmul.mubr.f32.gmra.mxu0 %v430
    %v518 = vpop.f32.mrf.mxu0
    %v519 = vadd.f32 0.0, %v518
    %v520 = vpop.f32.mrf.mxu0
    %521 = vdwg.mxu0
    %v522 = vadd.f32 %v435, %v519
    %v523 = vtanh.pop %v522
    %v524 = vpack.c.bf16 %v523, %v523
    %s525 = scalar_lea.vmem [#allocation9], 16
    %526 = vst [vmem:[%s525] sm:$0xf] %v524
    %s527 = scalar_lea.vmem [#allocation3], 40
    %v528 = vld [vmem:[%s527] sm:$0xff]
    %v529 = vld [vmem:[#allocation8] sm:$0xff]
    %v530 = vld [vmem:[#allocation8 + $0x8] sm:$0xff]
    %v531 = vld [vmem:[#allocation8 + $0x10] sm:$0xff]
    %v532 = vld [vmem:[#allocation8 + $0x18] sm:$0xff]
    %v533 = vld [vmem:[#allocation8 + $0x20] sm:$0xff]
    %v534 = vld [vmem:[#allocation8 + $0x28] sm:$0xff]
    %v535 = vld [vmem:[#allocation8 + $0x30] sm:$0xff]
    %v536 = vld [vmem:[#allocation8 + $0x38] sm:$0xff]
    %v537 = vld [vmem:[#allocation8 + $0x40] sm:$0xff]
    %v538 = vld [vmem:[#allocation8 + $0x48] sm:$0xff]
    %v539 = vld [vmem:[#allocation8 + $0x50] sm:$0xff]
    %v540 = vld [vmem:[#allocation8 + $0x58] sm:$0xff]
    %v541 = vld [vmem:[#allocation8 + $0x60] sm:$0xff]
    %v542 = vld [vmem:[#allocation8 + $0x68] sm:$0xff]
    %v543 = vld [vmem:[#allocation8 + $0x70] sm:$0xff]
    %v544 = vld [vmem:[#allocation8 + $0x78] sm:$0xff]
    %545 = vmatprep.subr.mxu0 0.0
    %546 = vmatpush1.msra.mxu0 %v544
    %547 = vmatprep.subr.mxu0 0.0
    %548 = vmatpush1.msra.mxu0 %v543
    %549 = vmatprep.subr.mxu0 0.0
    %550 = vmatpush1.msra.mxu0 %v542
    %551 = vmatprep.subr.mxu0 0.0
    %552 = vmatpush1.msra.mxu0 %v541
    %553 = vmatprep.subr.mxu0 0.0
    %554 = vmatpush1.msra.mxu0 %v540
    %555 = vmatprep.subr.mxu0 0.0
    %556 = vmatpush1.msra.mxu0 %v539
    %557 = vmatprep.subr.mxu0 0.0
    %558 = vmatpush1.msra.mxu0 %v538
    %559 = vmatprep.subr.mxu0 0.0
    %560 = vmatpush1.msra.mxu0 %v537
    %561 = vmatprep.subr.mxu0 0.0
    %562 = vmatpush1.msra.mxu0 %v536
    %563 = vmatprep.subr.mxu0 0.0
    %564 = vmatpush1.msra.mxu0 %v535
    %565 = vmatprep.subr.mxu0 0.0
    %566 = vmatpush1.msra.mxu0 %v534
    %567 = vmatprep.subr.mxu0 0.0
    %568 = vmatpush1.msra.mxu0 %v533
    %569 = vmatprep.subr.mxu0 0.0
    %570 = vmatpush1.msra.mxu0 %v532
    %571 = vmatprep.subr.mxu0 0.0
    %572 = vmatpush1.msra.mxu0 %v531
    %573 = vmatprep.subr.mxu0 0.0
    %574 = vmatpush1.msra.mxu0 %v530
    %575 = vmatprep.subr.mxu0 0.0
    %576 = vmatpush1.msra.mxu0 %v529
    %577 = vmatprep.subr.mxu0 0.0
    %578 = vmatpush2.msra.mxu0 0.0
    %579 = vmatprep.subr.mxu0 0.0
    %580 = vmatpush2.msra.mxu0 0.0
    %581 = vmatprep.subr.mxu0 0.0
    %582 = vmatpush2.msra.mxu0 0.0
    %583 = vmatprep.subr.mxu0 0.0
    %584 = vmatpush2.msra.mxu0 0.0
    %585 = vmatprep.subr.mxu0 0.0
    %586 = vmatpush2.msra.mxu0 0.0
    %587 = vmatprep.subr.mxu0 0.0
    %588 = vmatpush2.msra.mxu0 0.0
    %589 = vmatprep.subr.mxu0 0.0
    %590 = vmatpush2.msra.mxu0 0.0
    %591 = vmatprep.subr.mxu0 0.0
    %592 = vmatpush2.msra.mxu0 0.0
    %593 = vmatprep.subr.mxu0 0.0
    %594 = vmatpush2.msra.mxu0 0.0
    %595 = vmatprep.subr.mxu0 0.0
    %596 = vmatpush2.msra.mxu0 0.0
    %597 = vmatprep.subr.mxu0 0.0
    %598 = vmatpush2.msra.mxu0 0.0
    %599 = vmatprep.subr.mxu0 0.0
    %600 = vmatpush2.msra.mxu0 0.0
    %601 = vmatprep.subr.mxu0 0.0
    %602 = vmatpush2.msra.mxu0 0.0
    %603 = vmatprep.subr.mxu0 0.0
    %604 = vmatpush2.msra.mxu0 0.0
    %605 = vmatprep.subr.mxu0 0.0
    %606 = vmatpush2.msra.mxu0 0.0
    %607 = vmatprep.subr.mxu0 0.0
    %608 = vmatpush2.msra.mxu0 0.0
    %609 = vmatprep.mubr.f32.mxu0 0.0
    %610 = vmatmul.mubr.f32.gmra.mxu0 %v523
    %v611 = vpop.f32.mrf.mxu0
    %v612 = vadd.f32 0.0, %v611
    %v613 = vpop.f32.mrf.mxu0
    %614 = vdwg.mxu0
    %v615 = vadd.f32 %v528, %v612
    %v616 = vtanh.pop %v615
    %v617 = vpack.c.bf16 %v616, %v616
    %s618 = scalar_lea.vmem [#allocation9], 20
    %619 = vst [vmem:[%s618] sm:$0xf] %v617
    %s620 = scalar_lea.vmem [#allocation3], 48
    %v621 = vld [vmem:[%s620] sm:$0xff]
    %v622 = vld [vmem:[#allocation8] sm:$0xff]
    %v623 = vld [vmem:[#allocation8 + $0x8] sm:$0xff]
    %v624 = vld [vmem:[#allocation8 + $0x10] sm:$0xff]
    %v625 = vld [vmem:[#allocation8 + $0x18] sm:$0xff]
    %v626 = vld [vmem:[#allocation8 + $0x20] sm:$0xff]
    %v627 = vld [vmem:[#allocation8 + $0x28] sm:$0xff]
    %v628 = vld [vmem:[#allocation8 + $0x30] sm:$0xff]
    %v629 = vld [vmem:[#allocation8 + $0x38] sm:$0xff]
    %v630 = vld [vmem:[#allocation8 + $0x40] sm:$0xff]
    %v631 = vld [vmem:[#allocation8 + $0x48] sm:$0xff]
    %v632 = vld [vmem:[#allocation8 + $0x50] sm:$0xff]
    %v633 = vld [vmem:[#allocation8 + $0x58] sm:$0xff]
    %v634 = vld [vmem:[#allocation8 + $0x60] sm:$0xff]
    %v635 = vld [vmem:[#allocation8 + $0x68] sm:$0xff]
    %v636 = vld [vmem:[#allocation8 + $0x70] sm:$0xff]
    %v637 = vld [vmem:[#allocation8 + $0x78] sm:$0xff]
    %638 = vmatprep.subr.mxu0 0.0
    %639 = vmatpush1.msra.mxu0 %v637
    %640 = vmatprep.subr.mxu0 0.0
    %641 = vmatpush1.msra.mxu0 %v636
    %642 = vmatprep.subr.mxu0 0.0
    %643 = vmatpush1.msra.mxu0 %v635
    %644 = vmatprep.subr.mxu0 0.0
    %645 = vmatpush1.msra.mxu0 %v634
    %646 = vmatprep.subr.mxu0 0.0
    %647 = vmatpush1.msra.mxu0 %v633
    %648 = vmatprep.subr.mxu0 0.0
    %649 = vmatpush1.msra.mxu0 %v632
    %650 = vmatprep.subr.mxu0 0.0
    %651 = vmatpush1.msra.mxu0 %v631
    %652 = vmatprep.subr.mxu0 0.0
    %653 = vmatpush1.msra.mxu0 %v630
    %654 = vmatprep.subr.mxu0 0.0
    %655 = vmatpush1.msra.mxu0 %v629
    %656 = vmatprep.subr.mxu0 0.0
    %657 = vmatpush1.msra.mxu0 %v628
    %658 = vmatprep.subr.mxu0 0.0
    %659 = vmatpush1.msra.mxu0 %v627
    %660 = vmatprep.subr.mxu0 0.0
    %661 = vmatpush1.msra.mxu0 %v626
    %662 = vmatprep.subr.mxu0 0.0
    %663 = vmatpush1.msra.mxu0 %v625
    %664 = vmatprep.subr.mxu0 0.0
    %665 = vmatpush1.msra.mxu0 %v624
    %666 = vmatprep.subr.mxu0 0.0
    %667 = vmatpush1.msra.mxu0 %v623
    %668 = vmatprep.subr.mxu0 0.0
    %669 = vmatpush1.msra.mxu0 %v622
    %670 = vmatprep.subr.mxu0 0.0
    %671 = vmatpush2.msra.mxu0 0.0
    %672 = vmatprep.subr.mxu0 0.0
    %673 = vmatpush2.msra.mxu0 0.0
    %674 = vmatprep.subr.mxu0 0.0
    %675 = vmatpush2.msra.mxu0 0.0
    %676 = vmatprep.subr.mxu0 0.0
    %677 = vmatpush2.msra.mxu0 0.0
    %678 = vmatprep.subr.mxu0 0.0
    %679 = vmatpush2.msra.mxu0 0.0
    %680 = vmatprep.subr.mxu0 0.0
    %681 = vmatpush2.msra.mxu0 0.0
    %682 = vmatprep.subr.mxu0 0.0
    %683 = vmatpush2.msra.mxu0 0.0
    %684 = vmatprep.subr.mxu0 0.0
    %685 = vmatpush2.msra.mxu0 0.0
    %686 = vmatprep.subr.mxu0 0.0
    %687 = vmatpush2.msra.mxu0 0.0
    %688 = vmatprep.subr.mxu0 0.0
    %689 = vmatpush2.msra.mxu0 0.0
    %690 = vmatprep.subr.mxu0 0.0
    %691 = vmatpush2.msra.mxu0 0.0
    %692 = vmatprep.subr.mxu0 0.0
    %693 = vmatpush2.msra.mxu0 0.0
    %694 = vmatprep.subr.mxu0 0.0
    %695 = vmatpush2.msra.mxu0 0.0
    %696 = vmatprep.subr.mxu0 0.0
    %697 = vmatpush2.msra.mxu0 0.0
    %698 = vmatprep.subr.mxu0 0.0
    %699 = vmatpush2.msra.mxu0 0.0
    %700 = vmatprep.subr.mxu0 0.0
    %701 = vmatpush2.msra.mxu0 0.0
    %702 = vmatprep.mubr.f32.mxu0 0.0
    %703 = vmatmul.mubr.f32.gmra.mxu0 %v616
    %v704 = vpop.f32.mrf.mxu0
    %v705 = vadd.f32 0.0, %v704
    %v706 = vpop.f32.mrf.mxu0
    %707 = vdwg.mxu0
    %v708 = vadd.f32 %v621, %v705
    %v709 = vtanh.pop %v708
    %v710 = vpack.c.bf16 %v709, %v709
    %s711 = scalar_lea.vmem [#allocation9], 24
    %712 = vst [vmem:[%s711] sm:$0xf] %v710
    %s713 = scalar_lea.vmem [#allocation3], 56
    %v714 = vld [vmem:[%s713] sm:$0xff]
    %v715 = vld [vmem:[#allocation8] sm:$0xff]
    %v716 = vld [vmem:[#allocation8 + $0x8] sm:$0xff]
    %v717 = vld [vmem:[#allocation8 + $0x10] sm:$0xff]
    %v718 = vld [vmem:[#allocation8 + $0x18] sm:$0xff]
    %v719 = vld [vmem:[#allocation8 + $0x20] sm:$0xff]
    %v720 = vld [vmem:[#allocation8 + $0x28] sm:$0xff]
    %v721 = vld [vmem:[#allocation8 + $0x30] sm:$0xff]
    %v722 = vld [vmem:[#allocation8 + $0x38] sm:$0xff]
    %v723 = vld [vmem:[#allocation8 + $0x40] sm:$0xff]
    %v724 = vld [vmem:[#allocation8 + $0x48] sm:$0xff]
    %v725 = vld [vmem:[#allocation8 + $0x50] sm:$0xff]
    %v726 = vld [vmem:[#allocation8 + $0x58] sm:$0xff]
    %v727 = vld [vmem:[#allocation8 + $0x60] sm:$0xff]
    %v728 = vld [vmem:[#allocation8 + $0x68] sm:$0xff]
    %v729 = vld [vmem:[#allocation8 + $0x70] sm:$0xff]
    %v730 = vld [vmem:[#allocation8 + $0x78] sm:$0xff]
    %731 = vmatprep.subr.mxu0 0.0
    %732 = vmatpush1.msra.mxu0 %v730
    %733 = vmatprep.subr.mxu0 0.0
    %734 = vmatpush1.msra.mxu0 %v729
    %735 = vmatprep.subr.mxu0 0.0
    %736 = vmatpush1.msra.mxu0 %v728
    %737 = vmatprep.subr.mxu0 0.0
    %738 = vmatpush1.msra.mxu0 %v727
    %739 = vmatprep.subr.mxu0 0.0
    %740 = vmatpush1.msra.mxu0 %v726
    %741 = vmatprep.subr.mxu0 0.0
    %742 = vmatpush1.msra.mxu0 %v725
    %743 = vmatprep.subr.mxu0 0.0
    %744 = vmatpush1.msra.mxu0 %v724
    %745 = vmatprep.subr.mxu0 0.0
    %746 = vmatpush1.msra.mxu0 %v723
    %747 = vmatprep.subr.mxu0 0.0
    %748 = vmatpush1.msra.mxu0 %v722
    %749 = vmatprep.subr.mxu0 0.0
    %750 = vmatpush1.msra.mxu0 %v721
    %751 = vmatprep.subr.mxu0 0.0
    %752 = vmatpush1.msra.mxu0 %v720
    %753 = vmatprep.subr.mxu0 0.0
    %754 = vmatpush1.msra.mxu0 %v719
    %755 = vmatprep.subr.mxu0 0.0
    %756 = vmatpush1.msra.mxu0 %v718
    %757 = vmatprep.subr.mxu0 0.0
    %758 = vmatpush1.msra.mxu0 %v717
    %759 = vmatprep.subr.mxu0 0.0
    %760 = vmatpush1.msra.mxu0 %v716
    %761 = vmatprep.subr.mxu0 0.0
    %762 = vmatpush1.msra.mxu0 %v715
    %763 = vmatprep.subr.mxu0 0.0
    %764 = vmatpush2.msra.mxu0 0.0
    %765 = vmatprep.subr.mxu0 0.0
    %766 = vmatpush2.msra.mxu0 0.0
    %767 = vmatprep.subr.mxu0 0.0
    %768 = vmatpush2.msra.mxu0 0.0
    %769 = vmatprep.subr.mxu0 0.0
    %770 = vmatpush2.msra.mxu0 0.0
    %771 = vmatprep.subr.mxu0 0.0
    %772 = vmatpush2.msra.mxu0 0.0
    %773 = vmatprep.subr.mxu0 0.0
    %774 = vmatpush2.msra.mxu0 0.0
    %775 = vmatprep.subr.mxu0 0.0
    %776 = vmatpush2.msra.mxu0 0.0
    %777 = vmatprep.subr.mxu0 0.0
    %778 = vmatpush2.msra.mxu0 0.0
    %779 = vmatprep.subr.mxu0 0.0
    %780 = vmatpush2.msra.mxu0 0.0
    %781 = vmatprep.subr.mxu0 0.0
    %782 = vmatpush2.msra.mxu0 0.0
    %783 = vmatprep.subr.mxu0 0.0
    %784 = vmatpush2.msra.mxu0 0.0
    %785 = vmatprep.subr.mxu0 0.0
    %786 = vmatpush2.msra.mxu0 0.0
    %787 = vmatprep.subr.mxu0 0.0
    %788 = vmatpush2.msra.mxu0 0.0
    %789 = vmatprep.subr.mxu0 0.0
    %790 = vmatpush2.msra.mxu0 0.0
    %791 = vmatprep.subr.mxu0 0.0
    %792 = vmatpush2.msra.mxu0 0.0
    %793 = vmatprep.subr.mxu0 0.0
    %794 = vmatpush2.msra.mxu0 0.0
    %795 = vmatprep.mubr.f32.mxu0 0.0
    %796 = vmatmul.mubr.f32.gmra.mxu0 %v709
    %v797 = vpop.f32.mrf.mxu0
    %v798 = vadd.f32 0.0, %v797
    %v799 = vpop.f32.mrf.mxu0
    %800 = vdwg.mxu0
    %v801 = vadd.f32 %v714, %v798
    %v802 = vtanh.pop %v801
    %v803 = vpack.c.bf16 %v802, %v802
    %s804 = scalar_lea.vmem [#allocation9], 28
    %805 = vst [vmem:[%s804] sm:$0xf] %v803
    %806 = vst [vmem:[#allocation2] sm:$0xff] %v802
    %807 = vst [vmem:[#allocation10] sm:$0xff] %v802
    // Predicated region
    $region30: #{tpu_custom_call.1} parent=1 // pred_check
      _
    $region31: #{tpu_custom_call.1} parent=1 // pred_check_branch
      %809 = sbr.rel (0) target = $region33
    $region32: #{tpu_custom_call.1} parent=1 // pred_region
      %s811 = ssub.s32 512, 512
      %812 = vsyncadd [#allocation5], %s811
      %s813 = sshll.u32 [#allocation9], 4
      %s814 = int_to_ptr.vmem [resolvable:$true] %s813
      %819 = dma.vmem_to_hbm [thread:$0]  %s814, 512, %s3, [#allocation5], 64, 64, 4
    $region33: #{tpu_custom_call.1} parent=1 // pred_fallthru
      _
    // Predicated region
    $region34: #{tpu_custom_call.1} parent=1 // pred_check
      _
    $region35: #{tpu_custom_call.1} parent=1 // pred_check_branch
      %821 = sbr.rel (0) target = $region37
    $region36: #{tpu_custom_call.1} parent=1 // pred_region
      %s823 = ssub.s32 128, 128
      %824 = vsyncadd [#allocation11], %s823
      %s826 = sshll.u32 [#allocation10], 4
      %s827 = int_to_ptr.vmem [resolvable:$true] %s826
      %829 = dma.vmem_to_hbm [thread:$0]  %s827, 128, %s4, [#allocation11]
    $region37: #{tpu_custom_call.1} parent=1 // pred_fallthru
      _
    // Predicated region
    $region38: #{tpu_custom_call.1} parent=1 // pred_check
      _
    $region39: #{tpu_custom_call.1} parent=1 // pred_check_branch
      %831 = sbr.rel (0) target = $region41
    $region40: #{tpu_custom_call.1} parent=1 // pred_region
      %832 = dma.done [#allocation5], 512
    $region41: #{tpu_custom_call.1} parent=1 // pred_fallthru
      _
    // Predicated region
    $region42: #{tpu_custom_call.1} parent=1 // pred_check
      _
    $region43: #{tpu_custom_call.1} parent=1 // pred_check_branch
      %834 = sbr.rel (0) target = $region45
    $region44: #{tpu_custom_call.1} parent=1 // pred_region
      %835 = dma.done [#allocation11], 128
    $region45: #{tpu_custom_call.1} parent=1 // pred_fallthru
      _
    %836 = vsyncpa [#allocation4], 1
    %837 = vsyncpa [#allocation7], 1
    %838 = vsyncpa [#allocation5], 1
    %839 = vsyncpa [#allocation11], 1

</llo_original>
